<compile_context>
chip_gen: v7x
topology: tpu7x:2x2x1
jax: 0.10.0
libtpu: 0.0.40
codegen_flags: <defaults>
</compile_context>

<pallas_src>
import functools

import jax
import jax.numpy as jnp
from jax.experimental import pallas as pl
from jax.experimental.pallas import tpu as pltpu

_MIB = 1024 * 1024


# ---------------------------------------------------------------------------
# Hardware queries (safe fallbacks if the query API is unavailable).
# ---------------------------------------------------------------------------
def _vmem_capacity_bytes():
    try:
        cap = int(pltpu.get_tpu_info().vmem_capacity_bytes)
        if cap > 0:
            return cap
    except Exception:
        pass
    return 64 * _MIB  # most conservative per-TensorCore VMEM (v7x)


def _tq_target():
    # v5e MXU is 4x(128x128): 128 query rows already saturate it.
    # v6e/v7x MXU is 2x(256x256): target 256 rows.
    try:
        kind = jax.devices()[0].device_kind.lower()
        if "v5 lite" in kind or "v5e" in kind or "v5lite" in kind:
            return 128
    except Exception:
        pass
    return 256


# ---------------------------------------------------------------------------
# VMEM estimators (include f32 intermediates; double-buffer only i/o blocks).
# ---------------------------------------------------------------------------
def _resident_bytes(bt, tq, Lk, D, itemsize):
    io = bt * (tq * D + Lk * D + tq * D + tq * Lk) * itemsize * 2  # dbl-buffered
    interm = bt * (3 * tq * Lk + tq * D) * 4                        # s, e, p, mix(f32)
    return io + interm


def _tiled_bytes(bt, tq, tk, D, itemsize):
    io = bt * (tq * D + tk * D + tq * D + tq * tk) * itemsize * 2
    scratch = bt * (2 * tq + tq * D) * 4                            # m, l, f32 acc
    interm = bt * (3 * tq * tk) * 4
    return io + scratch + interm


def _valid_q_tiles(Lq, target):
    """Legal Lq tiles: multiples of 8 that divide Lq (<= target), else full Lq."""
    cands = [d for d in range(8, min(Lq, target) + 1, 8) if Lq % d == 0]
    if not cands:
        cands = [Lq]  # a block extent equal to the full dim is always legal
    return sorted(set(cands), reverse=True)


def _choose_plan(B, Lq, Lk, D, itemsize, budget):
    tqs = _valid_q_tiles(Lq, _tq_target())

    # --- resident-Lk plan (exact single-pass softmax) ------------------------
    for tq in tqs:
        if _resident_bytes(1, tq, Lk, D, itemsize) <= budget:
            bt = 1
            # Batch packing only for the tiny-Lq regime; keep >= 2 grid steps so
            # both v7x TensorCores get work; keep bt*tq modest.
            if tq < 128:
                while (B % (2 * bt) == 0
                       and 2 * bt * tq <= 512
                       and (B // (2 * bt)) * (Lq // tq) >= 2
                       and _resident_bytes(2 * bt, tq, Lk, D, itemsize) <= budget):
                    bt *= 2
            return dict(mode="resident", bt=bt, tq=tq)

    # --- Lk-tiled exact two-pass fallback (long encoder contexts) ------------
    if Lk % 128 == 0 and Lk >= 256:
        tks = sorted((t for t in range(128, min(Lk, 1024) + 1, 128) if Lk % t == 0),
                     reverse=True)
        for tq in tqs:
            for tk in tks:
                if _tiled_bytes(1, tq, tk, D, itemsize) <= budget:
                    return dict(mode="lk_tiled", bt=1, tq=tq, tk=tk)

    # Last resort: smallest resident config, rely on vmem_limit_bytes headroom.
    return dict(mode="resident", bt=1, tq=tqs[-1])


# ---------------------------------------------------------------------------
# Kernels
# ---------------------------------------------------------------------------
def _attn_kernel_2d(q_ref, ctx_ref, mix_ref, attn_ref):
    # Batch dim squeezed: q (tq, D), ctx (Lk, D) -> clean 2-D MXU matmuls.
    q = q_ref[...]
    c = ctx_ref[...]
    # scores = q @ ctx^T, transpose folded into the MXU contraction.
    s = jnp.einsum("qd,kd->qk", q, c, preferred_element_type=jnp.float32)
    m = jnp.max(s, axis=-1, keepdims=True)
    e = jnp.exp(s - m)
    p = e / jnp.sum(e, axis=-1, keepdims=True)   # exact softmax (1e-5 parity)
    attn_ref[...] = p.astype(attn_ref.dtype)
    mix_ref[...] = jnp.einsum("qk,kd->qd", p, c,
                              preferred_element_type=jnp.float32).astype(mix_ref.dtype)


def _attn_kernel_batched(q_ref, ctx_ref, mix_ref, attn_ref):
    # Several batches packed per grid step (tiny-Lq regime).
    q = q_ref[...]
    c = ctx_ref[...]
    s = jnp.einsum("bqd,bkd->bqk", q, c, preferred_element_type=jnp.float32)
    m = jnp.max(s, axis=-1, keepdims=True)
    e = jnp.exp(s - m)
    p = e / jnp.sum(e, axis=-1, keepdims=True)
    attn_ref[...] = p.astype(attn_ref.dtype)
    mix_ref[...] = jnp.einsum("bqk,bkd->bqd", p, c,
                              preferred_element_type=jnp.float32).astype(mix_ref.dtype)


def _attn_kernel_lk_tiled(nk, q_ref, ctx_ref, mix_ref, attn_ref,
                          m_scr, l_scr, acc_scr):
    """Exact two-pass softmax over an Lk-tiled grid axis (innermost, 'arbitrary').

    k_step in [0, nk)     : pass 1 -> exact row max / denominator in scratch.
    k_step in [nk, 2*nk)  : pass 2 -> exact probabilities, attn tile store,
                            f32 mix accumulation, final mix store.
    The context is read twice from HBM; attn (the dominant traffic) is written
    exactly once per tile, lane-dense (tk is a multiple of 128).
    """
    k_step = pl.program_id(2)
    q = q_ref[...]
    c = ctx_ref[...]
    s = jnp.einsum("bqd,bkd->bqk", q, c, preferred_element_type=jnp.float32)

    @pl.when(k_step == 0)
    def _():
        m_scr[...] = jnp.full(m_scr.shape, -jnp.inf, m_scr.dtype)
        l_scr[...] = jnp.zeros(l_scr.shape, l_scr.dtype)

    @pl.when(k_step < nk)
    def _():
        m_prev = m_scr[...]
        m_new = jnp.maximum(m_prev, jnp.max(s, axis=-1, keepdims=True))
        l_scr[...] = (l_scr[...] * jnp.exp(m_prev - m_new)
                      + jnp.sum(jnp.exp(s - m_new), axis=-1, keepdims=True))
        m_scr[...] = m_new

    @pl.when(k_step >= nk)
    def _():
        @pl.when(k_step == nk)
        def _():
            acc_scr[...] = jnp.zeros(acc_scr.shape, acc_scr.dtype)

        p = jnp.exp(s - m_scr[...]) / l_scr[...]          # exact: global max / denom
        attn_ref[...] = p.astype(attn_ref.dtype)
        acc_scr[...] += jnp.einsum("bqk,bkd->bqd", p, c,
                                   preferred_element_type=jnp.float32)

        @pl.when(k_step == 2 * nk - 1)
        def _():
            mix_ref[...] = acc_scr[...].astype(mix_ref.dtype)


# ---------------------------------------------------------------------------
# Wrapper
# ---------------------------------------------------------------------------
def attention_forward(output, encoder_hidden, *, attn_dtype=None,
                      vmem_budget_bytes=None):
    """output: (B, Lq, D), encoder_hidden: (B, Lk, D) -> (mix, attn)."""
    B, Lq, D = output.shape
    Bc, Lk, Dc = encoder_hidden.shape
    assert B == Bc and D == Dc
    dtype = output.dtype
    attn_dtype = dtype if attn_dtype is None else jnp.dtype(attn_dtype)
    itemsize = jnp.dtype(dtype).itemsize

    capacity = _vmem_capacity_bytes()
    if vmem_budget_bytes is None:
        # ~35% of physical VMEM for the pipelined working set (capped), leaving
        # headroom for Mosaic internal scratch; v7x (64 MiB) gets ~22 MiB,
        # v5e/v6e (128 MiB) get 40 MiB instead of the old fixed 8 MiB.
        budget = max(8 * _MIB, min(int(0.35 * capacity), 40 * _MIB))
    else:
        budget = int(vmem_budget_bytes)

    plan = _choose_plan(B, Lq, Lk, D, itemsize, budget)
    bt, tq = plan["bt"], plan["tq"]

    # Advisory cost estimate so XLA schedules around the custom call.
    flops = 4 * B * Lq * Lk * D
    transcendentals = B * Lq * Lk
    bytes_accessed = (itemsize * (B * Lq * D + B * Lk * D + B * Lq * D)
                      + jnp.dtype(attn_dtype).itemsize * B * Lq * Lk)

    if plan["mode"] == "resident":
        est = _resident_bytes(bt, tq, Lk, D, itemsize)
        grid = (B // bt, Lq // tq)
        if bt == 1:
            kernel = _attn_kernel_2d
            bdim = None                       # squeeze batch -> 2-D MXU matmuls
        else:
            kernel = _attn_kernel_batched
            bdim = bt
        grid_spec = pltpu.PrefetchScalarGridSpec(
            num_scalar_prefetch=0,
            grid=grid,
            in_specs=[
                pl.BlockSpec((bdim, tq, D), lambda b, i: (b, i, 0)),
                pl.BlockSpec((bdim, Lk, D), lambda b, i: (b, 0, 0)),
            ],
            out_specs=[
                pl.BlockSpec((bdim, tq, D), lambda b, i: (b, i, 0)),
                # Full Lk as last dim: lane-dense whenever Lk % 128 == 0.
                pl.BlockSpec((bdim, tq, Lk), lambda b, i: (b, i, 0)),
            ],
        )
        dim_sem = ("parallel", "parallel")
    else:
        tk = plan["tk"]
        nk = Lk // tk
        est = _tiled_bytes(bt, tq, tk, D, itemsize)
        grid = (B // bt, Lq // tq, 2 * nk)
        kernel = functools.partial(_attn_kernel_lk_tiled, nk)
        flops = 6 * B * Lq * Lk * D           # scores recomputed in pass 2
        transcendentals = 2 * B * Lq * Lk
        bytes_accessed += itemsize * B * Lk * D  # context read twice
        grid_spec = pltpu.PrefetchScalarGridSpec(
            num_scalar_prefetch=0,
            grid=grid,
            in_specs=[
                pl.BlockSpec((bt, tq, D), lambda b, i, k: (b, i, 0)),
                pl.BlockSpec((bt, tk, D), lambda b, i, k: (b, k % nk, 0)),
            ],
            out_specs=[
                pl.BlockSpec((bt, tq, D), lambda b, i, k: (b, i, 0)),
                # Held on block 0 during pass 1 (no spurious writebacks), then
                # written once per Lk tile during pass 2; tk % 128 == 0 so the
                # stores are lane-dense.
                pl.BlockSpec((bt, tq, tk),
                             lambda b, i, k: (b, i, jnp.maximum(k - nk, 0))),
            ],
            scratch_shapes=[
                pltpu.VMEM((bt, tq, 1), jnp.float32),   # running row max
                pltpu.VMEM((bt, tq, 1), jnp.float32),   # running denominator
                pltpu.VMEM((bt, tq, D), jnp.float32),   # f32 mix accumulator
            ],
        )
        dim_sem = ("parallel", "parallel", "arbitrary")

    # Tell the compiler the scoped-VMEM ceiling that matches the chosen tiles.
    vmem_limit = int(min(0.7 * capacity, max(32 * _MIB, 1.5 * est)))

    cost = pl.CostEstimate(flops=int(flops),
                           transcendentals=int(transcendentals),
                           bytes_accessed=int(bytes_accessed))

    mix, attn = pl.pallas_call(
        kernel,
        out_shape=(
            jax.ShapeDtypeStruct((B, Lq, D), dtype),
            jax.ShapeDtypeStruct((B, Lq, Lk), attn_dtype),
        ),
        grid_spec=grid_spec,
        compiler_params=pltpu.CompilerParams(
            dimension_semantics=dim_sem,
            vmem_limit_bytes=vmem_limit),
        cost_estimate=cost,
    )(output, encoder_hidden)
    return mix, attn


def make_unused_linear_params(dim, key):
    """Deterministic init of linear_out / linear_out2 (declared in __init__ but
    never used by forward(); materialized only for module fidelity)."""
    k1, k2, k3, k4 = jax.random.split(key, 4)
    w1 = jax.random.normal(k1, (dim, dim * 2 + 384), jnp.float32) * 0.02
    b1 = jax.random.normal(k2, (dim,), jnp.float32) * 0.02
    w2 = jax.random.normal(k3, (dim, dim * 2), jnp.float32) * 0.02
    b2 = jax.random.normal(k4, (dim,), jnp.float32) * 0.02
    return (w1, b1), (w2, b2)


# ---------------------------------------------------------------------------
# Reference + tests
# ---------------------------------------------------------------------------
def _reference(output, encoder_hidden):
    s = jnp.einsum("bqd,bkd->bqk", output, encoder_hidden)
    p = jax.nn.softmax(s, axis=-1)
    mix = jnp.einsum("bqk,bkd->bqd", p, encoder_hidden)
    return mix, p


def _check(name, B, Lq, Lk, D, key, **kwargs):
    kq, kc = jax.random.split(key)
    output = jax.random.normal(kq, (B, Lq, D), jnp.float32)
    context = jax.random.normal(kc, (B, Lk, D), jnp.float32)
    mix, attn = attention_forward(output, context, **kwargs)
    mix = jax.block_until_ready(mix)
    attn = jax.block_until_ready(attn)
    mix_ref, attn_ref = _reference(output, context)
    assert jnp.allclose(mix, mix_ref, atol=1e-5, rtol=1e-5), f"mix mismatch: {name}"
    assert jnp.allclose(attn, attn_ref, atol=1e-5, rtol=1e-5), f"attn mismatch: {name}"


if __name__ == "__main__":
    key = jax.random.PRNGKey(0)
    k1, k2, k3, k4, kp = jax.random.split(key, 5)

    # Module-sized small example: resident Lk, batch dim squeezed (2-D matmuls).
    _check("small", B=2, Lq=8, Lk=16, D=32, key=k1)
    # Tiny-Lq regime with batch packing (bt > 1, batched 3-D contraction).
    _check("packed", B=8, Lq=8, Lk=16, D=32, key=k2)
    # Large-Lq resident path (tq >= 128, lane-dense attn since Lk % 128 == 0).
    _check("large_q", B=2, Lq=256, Lk=128, D=32, key=k3)
    # Long-context fallback: Lk tiled with an exact two-pass softmax
    # (forced here with a tiny VMEM budget so the path is exercised & verified).
    _check("lk_tiled", B=2, Lq=16, Lk=256, D=32, key=k4,
           vmem_budget_bytes=96 * 1024)

    # Parameters from __init__ (unused in forward, kept for module fidelity).
    _unused_params = make_unused_linear_params(32, kp)

    print("KERNEL_OK")
</pallas_src>

<mosaic_0001>
module attributes {stable_mosaic.version = 11 : i64} {
  func.func @_attn_kernel_2d(%arg0: i32, %arg1: i32, %arg2: memref<1x8x32xf32, #tpu.memory_space<vmem>>, %arg3: memref<1x16x32xf32, #tpu.memory_space<vmem>>, %arg4: memref<1x8x32xf32, #tpu.memory_space<vmem>>, %arg5: memref<1x8x16xf32, #tpu.memory_space<vmem>>) attributes {dimension_semantics = [#tpu.dimension_semantics<parallel>, #tpu.dimension_semantics<parallel>], iteration_bounds = array<i64: 2, 1>, scalar_prefetch = 0 : i64, scratch_operands = 0 : i64, tpu.core_type = #tpu.core_type<tc>, window_params = [{transform_indices = @transform_0, window_bounds = array<i64: 1, 8, 32>}, {transform_indices = @transform_1, window_bounds = array<i64: 1, 16, 32>}, {transform_indices = @transform_2, window_bounds = array<i64: 1, 8, 32>}, {transform_indices = @transform_3, window_bounds = array<i64: 1, 8, 16>}]} {
    %c0 = arith.constant 0 : index
    %c0_0 = arith.constant 0 : index
    %c0_1 = arith.constant 0 : index
    %0 = vector.load %arg2[%c0, %c0_0, %c0_1] : memref<1x8x32xf32, #tpu.memory_space<vmem>>, vector<1x8x32xf32>
    %1 = vector.shape_cast %0 : vector<1x8x32xf32> to vector<8x32xf32>
    %c0_2 = arith.constant 0 : index
    %c0_3 = arith.constant 0 : index
    %c0_4 = arith.constant 0 : index
    %2 = vector.load %arg3[%c0_2, %c0_3, %c0_4] : memref<1x16x32xf32, #tpu.memory_space<vmem>>, vector<1x16x32xf32>
    %3 = vector.shape_cast %2 : vector<1x16x32xf32> to vector<16x32xf32>
    "tpu.trace_start"() <{level = 10 : i32, message = "qd,kd->qk"}> : () -> ()
    %cst = arith.constant dense<0.000000e+00> : vector<8x16xf32>
    %4 = tpu.matmul %1, %3, %cst {dimension_numbers = #tpu.dot_dimension_numbers<[1], [1], [0], [0], [0, 0, 1, 0], [], []>} : vector<8x32xf32>, vector<16x32xf32>, vector<8x16xf32> -> vector<8x16xf32>
    "tpu.trace_stop"() : () -> ()
    %cst_5 = arith.constant dense<0xFF800000> : vector<8xf32>
    %5 = vector.multi_reduction <maximumf>, %4, %cst_5 [1] : vector<8x16xf32> to vector<8xf32>
    %6 = vector.shape_cast %5 : vector<8xf32> to vector<8x1xf32>
    %7 = vector.broadcast %6 : vector<8x1xf32> to vector<8x16xf32>
    %8 = arith.subf %4, %7 : vector<8x16xf32>
    %9 = math.exp %8 : vector<8x16xf32>
    %cst_6 = arith.constant dense<0.000000e+00> : vector<8xf32>
    %10 = vector.multi_reduction <add>, %9, %cst_6 [1] : vector<8x16xf32> to vector<8xf32>
    %11 = vector.shape_cast %10 : vector<8xf32> to vector<8x1xf32>
    %12 = vector.broadcast %11 : vector<8x1xf32> to vector<8x16xf32>
    %13 = arith.divf %9, %12 : vector<8x16xf32>
    %c0_7 = arith.constant 0 : index
    %c0_8 = arith.constant 0 : index
    %c0_9 = arith.constant 0 : index
    %14 = vector.load %arg5[%c0_7, %c0_8, %c0_9] : memref<1x8x16xf32, #tpu.memory_space<vmem>>, vector<1x8x16xf32>
    %15 = vector.shape_cast %14 : vector<1x8x16xf32> to vector<8x16xf32>
    %16 = vector.shape_cast %13 : vector<8x16xf32> to vector<1x8x16xf32>
    tpu.vector_store %arg5[%c0_7, %c0_8, %c0_9], %16 {strides = array<i32>} : memref<1x8x16xf32, #tpu.memory_space<vmem>>, vector<1x8x16xf32>,
    "tpu.trace_start"() <{level = 10 : i32, message = "qk,kd->qd"}> : () -> ()
    %cst_10 = arith.constant dense<0.000000e+00> : vector<8x32xf32>
    %17 = tpu.matmul %13, %3, %cst_10 {dimension_numbers = #tpu.dot_dimension_numbers<[1], [0], [0], [1], [0, 0, 1, 1], [], []>} : vector<8x16xf32>, vector<16x32xf32>, vector<8x32xf32> -> vector<8x32xf32>
    "tpu.trace_stop"() : () -> ()
    %c0_11 = arith.constant 0 : index
    %c0_12 = arith.constant 0 : index
    %c0_13 = arith.constant 0 : index
    %18 = vector.load %arg4[%c0_11, %c0_12, %c0_13] : memref<1x8x32xf32, #tpu.memory_space<vmem>>, vector<1x8x32xf32>
    %19 = vector.shape_cast %18 : vector<1x8x32xf32> to vector<8x32xf32>
    %20 = vector.shape_cast %17 : vector<8x32xf32> to vector<1x8x32xf32>
    tpu.vector_store %arg4[%c0_11, %c0_12, %c0_13], %20 {strides = array<i32>} : memref<1x8x32xf32, #tpu.memory_space<vmem>>, vector<1x8x32xf32>,
    return
  }
  func.func @transform_0(%arg0: i32, %arg1: i32) -> (i32, i32, i32) {
    %c0_i32 = arith.constant 0 : i32
    %c0_i32_0 = arith.constant 0 : i32
    return %arg0, %arg1, %c0_i32 : i32, i32, i32
  }
  func.func @transform_1(%arg0: i32, %arg1: i32) -> (i32, i32, i32) {
    %c0_i32 = arith.constant 0 : i32
    %c0_i32_0 = arith.constant 0 : i32
    %c0_i32_1 = arith.constant 0 : i32
    return %arg0, %c0_i32, %c0_i32_0 : i32, i32, i32
  }
  func.func @transform_2(%arg0: i32, %arg1: i32) -> (i32, i32, i32) {
    %c0_i32 = arith.constant 0 : i32
    %c0_i32_0 = arith.constant 0 : i32
    return %arg0, %arg1, %c0_i32 : i32, i32, i32
  }
  func.func @transform_3(%arg0: i32, %arg1: i32) -> (i32, i32, i32) {
    %c0_i32 = arith.constant 0 : i32
    %c0_i32_0 = arith.constant 0 : i32
    return %arg0, %arg1, %c0_i32 : i32, i32, i32
  }
}

</mosaic_0001>

<llo_original>
// kernel: tpu_custom_call.1
$region0: #{tpu_custom_call.1}
  #allocation0 [shape = 'u32[]', space=smem, size = 0x4, offset = 0x4, fixed_abs, tag = 'smem constant byte address 0x4 - core index']
  #allocation1 [shape = 'u32[144,128]{1,0:T(1,128)}', space=vmem, size = 0x12000, scoped, tag = 'internal scratch']
  %s0 = inlined_call_operand.hbm [shape: f32[2,8,32], index: 0, kind: input, shape index: {}]
  %s1 = inlined_call_operand.hbm [shape: f32[2,16,32], index: 1, kind: input, shape index: {}]
  %s2 = inlined_call_operand.hbm [shape: f32[2,8,32], index: 2, kind: output, shape index: {0}]
  %s3 = inlined_call_operand.hbm [shape: f32[2,8,16], index: 3, kind: output, shape index: {1}]
  %4 = xla_tuple %s2, %s3
  %s5 = sld [smem:[#allocation0]]
  $region57: #{tpu_custom_call.1} parent=0
    _
  %s7 = ssub.s32 1, %s5
  %s8 = scalar_select 0, %s7, %s5
  $region1: #{tpu_custom_call.1} parent=0
    #allocation2 [shape = 'u8[8192]{0}', space=vmem, size = 0x2000, scoped, tag = 'input window, operand 0']
    #allocation3 [shape = 's32[2]{0}', space=sflag, size = 0x8, scoped, tag = 'scoped memory for tpu_custom_call.1']
    #allocation4 [shape = 's32[2]{0}', space=sflag, size = 0x8, scoped, tag = 'scoped memory for tpu_custom_call.1']
    #allocation5 [shape = 'u8[16384]{0}', space=vmem, size = 0x4000, scoped, tag = 'input window, operand 1']
    #allocation6 [shape = 's32[2]{0}', space=sflag, size = 0x8, scoped, tag = 'scoped memory for tpu_custom_call.1']
    #allocation7 [shape = 'u8[8192]{0}', space=vmem, size = 0x2000, scoped, tag = 'output window, operand 0']
    #allocation8 [shape = 'u8[8192]{0}', space=vmem, size = 0x2000, scoped, tag = 'output window, operand 1']
    #allocation9 [shape = 's32[2]{0}', space=sflag, size = 0x8, scoped, tag = 'scoped memory for tpu_custom_call.1']
    %9 = vsyncpa [#allocation3], 0
    %s10 = scalar_lea.sflag [#allocation3], 1
    %11 = vsyncpa %s10, 0
    %12 = vsyncpa [#allocation6], 0
    %s13 = scalar_lea.sflag [#allocation6], 1
    %14 = vsyncpa %s13, 0
    %15 = vsyncpa [#allocation4], 0
    %s16 = scalar_lea.sflag [#allocation4], 1
    %17 = vsyncpa %s16, 0
    %18 = vsyncpa [#allocation9], 0
    %s19 = scalar_lea.sflag [#allocation9], 1
    %20 = vsyncpa %s19, 0
    loop: start=0, step=1, limit=4
    $region2: #{tpu_custom_call.1} parent=1 // loop_pre_header
      _
    $region3: #{tpu_custom_call.1} parent=1 // loop_header
      %s22 = sphi 0, %s26
      %p23 = scmp.ge.s32.totalorder %s22, 4
      %s29 = sphi 0, %s41
      %s30 = sphi 0, %s37
      %s31 = sphi 0, %s29
      %s32 = sphi 0, %s30
      %s33 = sphi 0, %s31
      %s34 = sphi 0, %s32
      %s46 = sphi 0, %s48
      %s49 = sphi 0, %s46
      %s50 = sphi 0, %s49
      %s66 = sphi 0, %s50
      %s72 = sphi 0, %s74
      %s75 = sphi 0, %s72
      %s76 = sphi 0, %s75
      %s92 = sphi 0, %s76
      %s100 = sphi 0, %s102
      %s103 = sphi 0, %s100
      %s104 = sphi 0, %s103
      %s120 = sphi 0, %s104
      %s128 = sphi 0, %s130
      %s131 = sphi 0, %s128
      %s132 = sphi 0, %s131
      %s148 = sphi 0, %s132
    $region4: #{tpu_custom_call.1} parent=1 // loop_header_branch
      %25 = sbr.rel (%p23) target = $region8
    $region5: #{tpu_custom_call.1} parent=1 // loop_body
      %s27 = ssub.s32 %s22, 1
      %s28 = ssub.s32 %s22, 2
      %s35 = sadd.s32 1, %s30
      %p36 = scmp.ge.s32.totalorder %s35, 1
      %s37 = scalar_select %p36, 0, %s35
      %s38 = sadd.s32 1, %s29
      %s39 = scalar_select %p36, %s38, %s29
      %p40 = scmp.ge.s32.totalorder %s39, 2
      %s41 = scalar_select %p40, 0, %s39
      %s42 = ssub.s32 %s29, %s41
      %s43 = ssub.s32 %s30, %s37
      %s44 = sor.u32 %s42, %s43
      %p45 = scmp.eq.s32.totalorder %s44, 0
      %s47 = sadd.s32 %s46, 1
      %s48 = scalar_select %p45, %s46, %s47
      %p51 = pneg %p45
      %p52 = scmp.eq.s32.totalorder %s22, 1
      %p53 = por %p51, %p52
      %p54 = scmp.ne.s32.totalorder %s46, %s49
      %p55 = scmp.eq.s32.totalorder %s22, 0
      %p56 = por %p54, %p55
      %p57 = scmp.ne.s32.totalorder %s46, %s49
      %p58 = scmp.eq.s32.totalorder %s27, 1
      %p59 = por %p57, %p58
      %p60 = scmp.ne.s32.totalorder %s49, %s50
      %p61 = scmp.eq.s32.totalorder %s27, 0
      %p62 = por %p60, %p61
      %p63 = scmp.ne.s32.totalorder %s49, %s50
      %p64 = scmp.eq.s32.totalorder %s28, 1
      %p65 = por %p63, %p64
      %p67 = scmp.ne.s32.totalorder %s50, %s66
      %p68 = scmp.eq.s32.totalorder %s28, 0
      %p69 = por %p67, %p68
      %s70 = ssub.s32 %s29, %s41
      %p71 = scmp.eq.s32.totalorder %s70, 0
      %s73 = sadd.s32 %s72, 1
      %s74 = scalar_select %p71, %s72, %s73
      %p77 = pneg %p71
      %p78 = scmp.eq.s32.totalorder %s22, 1
      %p79 = por %p77, %p78
      %p80 = scmp.ne.s32.totalorder %s72, %s75
      %p81 = scmp.eq.s32.totalorder %s22, 0
      %p82 = por %p80, %p81
      %p83 = scmp.ne.s32.totalorder %s72, %s75
      %p84 = scmp.eq.s32.totalorder %s27, 1
      %p85 = por %p83, %p84
      %p86 = scmp.ne.s32.totalorder %s75, %s76
      %p87 = scmp.eq.s32.totalorder %s27, 0
      %p88 = por %p86, %p87
      %p89 = scmp.ne.s32.totalorder %s75, %s76
      %p90 = scmp.eq.s32.totalorder %s28, 1
      %p91 = por %p89, %p90
      %p93 = scmp.ne.s32.totalorder %s76, %s92
      %p94 = scmp.eq.s32.totalorder %s28, 0
      %p95 = por %p93, %p94
      %s96 = ssub.s32 %s29, %s41
      %s97 = ssub.s32 %s30, %s37
      %s98 = sor.u32 %s96, %s97
      %p99 = scmp.eq.s32.totalorder %s98, 0
      %s101 = sadd.s32 %s100, 1
      %s102 = scalar_select %p99, %s100, %s101
      %p105 = pneg %p99
      %p106 = scmp.eq.s32.totalorder %s22, 1
      %p107 = por %p105, %p106
      %p108 = scmp.ne.s32.totalorder %s100, %s103
      %p109 = scmp.eq.s32.totalorder %s22, 0
      %p110 = por %p108, %p109
      %p111 = scmp.ne.s32.totalorder %s100, %s103
      %p112 = scmp.eq.s32.totalorder %s27, 1
      %p113 = por %p111, %p112
      %p114 = scmp.ne.s32.totalorder %s103, %s104
      %p115 = scmp.eq.s32.totalorder %s27, 0
      %p116 = por %p114, %p115
      %p117 = scmp.ne.s32.totalorder %s103, %s104
      %p118 = scmp.eq.s32.totalorder %s28, 1
      %p119 = por %p117, %p118
      %p121 = scmp.ne.s32.totalorder %s104, %s120
      %p122 = scmp.eq.s32.totalorder %s28, 0
      %p123 = por %p121, %p122
      %s124 = ssub.s32 %s29, %s41
      %s125 = ssub.s32 %s30, %s37
      %s126 = sor.u32 %s124, %s125
      %p127 = scmp.eq.s32.totalorder %s126, 0
      %s129 = sadd.s32 %s128, 1
      %s130 = scalar_select %p127, %s128, %s129
      %p133 = pneg %p127
      %p134 = scmp.eq.s32.totalorder %s22, 1
      %p135 = por %p133, %p134
      %p136 = scmp.ne.s32.totalorder %s128, %s131
      %p137 = scmp.eq.s32.totalorder %s22, 0
      %p138 = por %p136, %p137
      %p139 = scmp.ne.s32.totalorder %s128, %s131
      %p140 = scmp.eq.s32.totalorder %s27, 1
      %p141 = por %p139, %p140
      %p142 = scmp.ne.s32.totalorder %s131, %s132
      %p143 = scmp.eq.s32.totalorder %s27, 0
      %p144 = por %p142, %p143
      %p145 = scmp.ne.s32.totalorder %s131, %s132
      %p146 = scmp.eq.s32.totalorder %s28, 1
      %p147 = por %p145, %p146
      %p149 = scmp.ne.s32.totalorder %s132, %s148
      %p150 = scmp.eq.s32.totalorder %s28, 0
      %p151 = por %p149, %p150
      %p152 = scmp.le.s32.totalorder 1, %s22
      %p153 = scmp.lt.s32.totalorder %s22, 3
      %p154 = pnand %p152, %p153
      %p155 = pneg %p154
      // Predicated region
      $region9: #{tpu_custom_call.1} parent=5 // pred_check
        _
      $region10: #{tpu_custom_call.1} parent=5 // pred_check_branch
        %157 = sbr.rel (%p154) target = $region12
      $region11: #{tpu_custom_call.1} parent=5 // pred_region
        %s158 = ssub.s32 %s22, 1
      $region12: #{tpu_custom_call.1} parent=5 // pred_fallthru
        _
      %p159 = scmp.lt.s32.totalorder %s22, 2
      // Predicated region
      $region13: #{tpu_custom_call.1} parent=5 // pred_check
        %p160 = pneg %p159
      $region14: #{tpu_custom_call.1} parent=5 // pred_check_branch
        %162 = sbr.rel (%p160) target = $region16
      $region15: #{tpu_custom_call.1} parent=5 // pred_region
        // Predicated region
        $region17: #{tpu_custom_call.1} parent=15 // pred_check
          %p163 = pneg %p56
        $region18: #{tpu_custom_call.1} parent=15 // pred_check_branch
          %165 = sbr.rel (%p163) target = $region20
        $region19: #{tpu_custom_call.1} parent=15 // pred_region
          %s166 = sand.u32 %s46, 1
          %s167 = scalar_lea.sflag [#allocation3], %s166
          %s168 = sand.u32 %s46, 1
          %s169 = smul.addr %s168, 8
          %s170 = scalar_lea.vmem [#allocation2], %s169
          %s172 = ssub.s32 128, 128
          %173 = vsyncadd %s167, %s172
          %s174 = sadd.s32 %s30, %s29
          %s175 = smul.addr %s174, 128
          %s176 = scalar_lea.hbm %s0, %s175
          %s178 = sshll.u32 %s170, 4
          %s179 = int_to_ptr.vmem [resolvable:$true] %s178
          %181 = dma.hbm_to_vmem [thread:$0]  %s176, 128, %s179, %s167
        $region20: #{tpu_custom_call.1} parent=15 // pred_fallthru
          _
        // Predicated region
        $region21: #{tpu_custom_call.1} parent=15 // pred_check
          %p182 = pneg %p82
        $region22: #{tpu_custom_call.1} parent=15 // pred_check_branch
          %184 = sbr.rel (%p182) target = $region24
        $region23: #{tpu_custom_call.1} parent=15 // pred_region
          %s185 = sand.u32 %s72, 1
          %s186 = scalar_lea.sflag [#allocation6], %s185
          %s187 = sand.u32 %s72, 1
          %s188 = smul.addr %s187, 16
          %s189 = scalar_lea.vmem [#allocation5], %s188
          %s191 = ssub.s32 256, 256
          %192 = vsyncadd %s186, %s191
          %s193 = smul.addr %s29, 2
          %s194 = smul.addr %s193, 128
          %s195 = scalar_lea.hbm %s1, %s194
          %s196 = sshll.u32 %s189, 4
          %s197 = int_to_ptr.vmem [resolvable:$true] %s196
          %202 = dma.hbm_to_vmem [thread:$0]  %s195, 256, %s197, %s186, 128, 128, 8
        $region24: #{tpu_custom_call.1} parent=15 // pred_fallthru
          _
      $region16: #{tpu_custom_call.1} parent=5 // pred_fallthru
        _
      %p203 = scmp.le.s32.totalorder 1, %s22
      %p204 = scmp.lt.s32.totalorder %s22, 3
      %p205 = pnand %p203, %p204
      %p206 = pneg %p205
      // Predicated region
      $region25: #{tpu_custom_call.1} parent=5 // pred_check
        _
      $region26: #{tpu_custom_call.1} parent=5 // pred_check_branch
        %208 = sbr.rel (%p205) target = $region28
      $region27: #{tpu_custom_call.1} parent=5 // pred_region
        %s209 = ssub.s32 %s22, 1
        %s210 = sand.u32 %s49, 1
        %s211 = scalar_lea.sflag [#allocation3], %s210
        %s212 = sand.u32 %s49, 1
        %s213 = smul.addr %s212, 8
        %s214 = scalar_lea.vmem [#allocation2], %s213
        // Predicated region
        $region29: #{tpu_custom_call.1} parent=27 // pred_check
          %p215 = pneg %p62
        $region30: #{tpu_custom_call.1} parent=27 // pred_check_branch
          %217 = sbr.rel (%p215) target = $region32
        $region31: #{tpu_custom_call.1} parent=27 // pred_region
          %218 = dma.done %s211, 128
        $region32: #{tpu_custom_call.1} parent=27 // pred_fallthru
          _
        %s219 = sand.u32 %s75, 1
        %s220 = scalar_lea.sflag [#allocation6], %s219
        %s221 = sand.u32 %s75, 1
        %s222 = smul.addr %s221, 16
        %s223 = scalar_lea.vmem [#allocation5], %s222
        // Predicated region
        $region33: #{tpu_custom_call.1} parent=27 // pred_check
          %p224 = pneg %p88
        $region34: #{tpu_custom_call.1} parent=27 // pred_check_branch
          %226 = sbr.rel (%p224) target = $region36
        $region35: #{tpu_custom_call.1} parent=27 // pred_region
          %227 = dma.done %s220, 256
        $region36: #{tpu_custom_call.1} parent=27 // pred_fallthru
          _
        %s228 = sand.u32 %s49, 1
        %s229 = scalar_lea.sflag [#allocation3], %s228
        %s230 = sand.u32 %s49, 1
        %s231 = smul.addr %s230, 8
        %s232 = scalar_lea.vmem [#allocation2], %s231
        %p233 = pneg %p62
        %p234 = pneg %p59
        %s235 = sand.u32 %s75, 1
        %s236 = scalar_lea.sflag [#allocation6], %s235
        %s237 = sand.u32 %s75, 1
        %s238 = smul.addr %s237, 16
        %s239 = scalar_lea.vmem [#allocation5], %s238
        %p240 = pneg %p88
        %p241 = pneg %p85
        %p242 = pneg %p116
        %p243 = pneg %p113
        %s244 = sand.u32 %s103, 1
        %s245 = scalar_lea.sflag [#allocation4], %s244
        %s246 = sand.u32 %s103, 1
        %s247 = smul.addr %s246, 8
        %s248 = scalar_lea.vmem [#allocation7], %s247
        %p249 = pneg %p144
        %p250 = pneg %p141
        %s251 = sand.u32 %s131, 1
        %s252 = scalar_lea.sflag [#allocation9], %s251
        %s253 = sand.u32 %s131, 1
        %s254 = smul.addr %s253, 8
        %s255 = scalar_lea.vmem [#allocation8], %s254
        %v256 = vld [vmem:[%s214] sm:$0xff]
        %v257 = vld [vmem:[%s223] sm:$0xff]
        %v258 = vld [vmem:[%s223 + $0x8] sm:$0xff]
        %vm259 = vcmask 261120
        %v261 = vsel %vm259, %v256, 0
        %v264 = vsel %vm259, %v257, 0
        %v267 = vsel %vm259, %v258, 0
        %269 = vmatprep.subr.mxu0 0.0
        %270 = vmatpush1.xpose.msra.mxu0 %v264
        %271 = vmatprep.subr.mxu0 0.0
        %272 = vmatpush1.xpose.msra.mxu0 %v267
        %273 = vmatprep.subr.mxu0 0.0
        %274 = vmatpush1.xpose.msra.mxu0 0.0
        %275 = vmatprep.subr.mxu0 0.0
        %276 = vmatpush1.xpose.msra.mxu0 0.0
        %277 = vmatprep.subr.mxu0 0.0
        %278 = vmatpush1.xpose.msra.mxu0 0.0
        %279 = vmatprep.subr.mxu0 0.0
        %280 = vmatpush1.xpose.msra.mxu0 0.0
        %281 = vmatprep.subr.mxu0 0.0
        %282 = vmatpush1.xpose.msra.mxu0 0.0
        %283 = vmatprep.subr.mxu0 0.0
        %284 = vmatpush1.xpose.msra.mxu0 0.0
        %285 = vmatprep.subr.mxu0 0.0
        %286 = vmatpush1.xpose.msra.mxu0 0.0
        %287 = vmatprep.subr.mxu0 0.0
        %288 = vmatpush1.xpose.msra.mxu0 0.0
        %289 = vmatprep.subr.mxu0 0.0
        %290 = vmatpush1.xpose.msra.mxu0 0.0
        %291 = vmatprep.subr.mxu0 0.0
        %292 = vmatpush1.xpose.msra.mxu0 0.0
        %293 = vmatprep.subr.mxu0 0.0
        %294 = vmatpush1.xpose.msra.mxu0 0.0
        %295 = vmatprep.subr.mxu0 0.0
        %296 = vmatpush1.xpose.msra.mxu0 0.0
        %297 = vmatprep.subr.mxu0 0.0
        %298 = vmatpush1.xpose.msra.mxu0 0.0
        %299 = vmatprep.subr.mxu0 0.0
        %300 = vmatpush1.xpose.msra.mxu0 0.0
        %301 = vmatprep.subr.mxu0 0.0
        %302 = vmatpush1.xpose.msra.mxu0 0.0
        %303 = vmatprep.subr.mxu0 0.0
        %304 = vmatpush1.xpose.msra.mxu0 0.0
        %305 = vmatprep.subr.mxu0 0.0
        %306 = vmatpush1.xpose.msra.mxu0 0.0
        %307 = vmatprep.subr.mxu0 0.0
        %308 = vmatpush1.xpose.msra.mxu0 0.0
        %309 = vmatprep.subr.mxu0 0.0
        %310 = vmatpush1.xpose.msra.mxu0 0.0
        %311 = vmatprep.subr.mxu0 0.0
        %312 = vmatpush1.xpose.msra.mxu0 0.0
        %313 = vmatprep.subr.mxu0 0.0
        %314 = vmatpush1.xpose.msra.mxu0 0.0
        %315 = vmatprep.subr.mxu0 0.0
        %316 = vmatpush1.xpose.msra.mxu0 0.0
        %317 = vmatprep.subr.mxu0 0.0
        %318 = vmatpush1.xpose.msra.mxu0 0.0
        %319 = vmatprep.subr.mxu0 0.0
        %320 = vmatpush1.xpose.msra.mxu0 0.0
        %321 = vmatprep.subr.mxu0 0.0
        %322 = vmatpush1.xpose.msra.mxu0 0.0
        %323 = vmatprep.subr.mxu0 0.0
        %324 = vmatpush1.xpose.msra.mxu0 0.0
        %325 = vmatprep.subr.mxu0 0.0
        %326 = vmatpush1.xpose.msra.mxu0 0.0
        %327 = vmatprep.subr.mxu0 0.0
        %328 = vmatpush1.xpose.msra.mxu0 0.0
        %329 = vmatprep.subr.mxu0 0.0
        %330 = vmatpush1.xpose.msra.mxu0 0.0
        %331 = vmatprep.subr.mxu0 0.0
        %332 = vmatpush1.xpose.msra.mxu0 0.0
        %333 = vmatprep.mubr.f32.mxu0 0.0
        %334 = vmatmul.mubr.f32.gmra.mrb[0].mxu0 %v261
        %v335 = vpop.f32.mrb[0].mxu0
        %v336 = vadd.f32 0.0, %v335
        %v337 = vpop.f32.mrb[0].mxu0
        %338 = vdwg.mxu0
        %vm339 = vcmask 130048
        %v340 = vsel %vm339, %v336, -inf
        %341 = vmax.xlane.f32.xlu0 %v340
        %v342 = vpop.xlane.xlu0 %341
        %v343 = vsub.f32 %v336, %v342
        %v344 = vmul.f32 %v343, 1.442695
        %v345 = vpow.pop %v344
        %v346 = vsel %vm339, %v345, 0.0
        %347 = vadd.xlane.f32.xlu0 %v346
        %v348 = vpop.xlane.xlu0 %347
        %v349 = vrcp.pop %v348
        %v350 = vmul.f32 %v345, %v349
        %351 = vst.msk [vmem:[%s255] sm:$0xff] %vm339, %v350
        %v353 = vsel %vm339, %v350, 0
        %355 = vmatprep.subr.mxu0 0.0
        %356 = vmatpush1.msra.mxu0 %v257
        %357 = vmatprep.subr.mxu0 0.0
        %358 = vmatpush1.msra.mxu0 %v258
        %359 = vmatprep.subr.mxu0 0.0
        %360 = vmatpush1.msra.mxu0 0.0
        %361 = vmatprep.subr.mxu0 0.0
        %362 = vmatpush1.msra.mxu0 0.0
        %363 = vmatprep.subr.mxu0 0.0
        %364 = vmatpush1.msra.mxu0 0.0
        %365 = vmatprep.subr.mxu0 0.0
        %366 = vmatpush1.msra.mxu0 0.0
        %367 = vmatprep.subr.mxu0 0.0
        %368 = vmatpush1.msra.mxu0 0.0
        %369 = vmatprep.subr.mxu0 0.0
        %370 = vmatpush1.msra.mxu0 0.0
        %371 = vmatprep.subr.mxu0 0.0
        %372 = vmatpush1.msra.mxu0 0.0
        %373 = vmatprep.subr.mxu0 0.0
        %374 = vmatpush1.msra.mxu0 0.0
        %375 = vmatprep.subr.mxu0 0.0
        %376 = vmatpush1.msra.mxu0 0.0
        %377 = vmatprep.subr.mxu0 0.0
        %378 = vmatpush1.msra.mxu0 0.0
        %379 = vmatprep.subr.mxu0 0.0
        %380 = vmatpush1.msra.mxu0 0.0
        %381 = vmatprep.subr.mxu0 0.0
        %382 = vmatpush1.msra.mxu0 0.0
        %383 = vmatprep.subr.mxu0 0.0
        %384 = vmatpush1.msra.mxu0 0.0
        %385 = vmatprep.subr.mxu0 0.0
        %386 = vmatpush1.msra.mxu0 0.0
        %387 = vmatprep.subr.mxu0 0.0
        %388 = vmatpush1.msra.mxu0 0.0
        %389 = vmatprep.subr.mxu0 0.0
        %390 = vmatpush1.msra.mxu0 0.0
        %391 = vmatprep.subr.mxu0 0.0
        %392 = vmatpush1.msra.mxu0 0.0
        %393 = vmatprep.subr.mxu0 0.0
        %394 = vmatpush1.msra.mxu0 0.0
        %395 = vmatprep.subr.mxu0 0.0
        %396 = vmatpush1.msra.mxu0 0.0
        %397 = vmatprep.subr.mxu0 0.0
        %398 = vmatpush1.msra.mxu0 0.0
        %399 = vmatprep.subr.mxu0 0.0
        %400 = vmatpush1.msra.mxu0 0.0
        %401 = vmatprep.subr.mxu0 0.0
        %402 = vmatpush1.msra.mxu0 0.0
        %403 = vmatprep.subr.mxu0 0.0
        %404 = vmatpush1.msra.mxu0 0.0
        %405 = vmatprep.subr.mxu0 0.0
        %406 = vmatpush1.msra.mxu0 0.0
        %407 = vmatprep.subr.mxu0 0.0
        %408 = vmatpush1.msra.mxu0 0.0
        %409 = vmatprep.subr.mxu0 0.0
        %410 = vmatpush1.msra.mxu0 0.0
        %411 = vmatprep.subr.mxu0 0.0
        %412 = vmatpush1.msra.mxu0 0.0
        %413 = vmatprep.subr.mxu0 0.0
        %414 = vmatpush1.msra.mxu0 0.0
        %415 = vmatprep.subr.mxu0 0.0
        %416 = vmatpush1.msra.mxu0 0.0
        %417 = vmatprep.subr.mxu0 0.0
        %418 = vmatpush1.msra.mxu0 0.0
        %419 = vmatprep.mubr.f32.mxu0 0.0
        %420 = vmatmul.mubr.f32.gmra.mrb[0].mxu0 %v353
        %v421 = vpop.f32.mrb[0].mxu0
        %v422 = vadd.f32 0.0, %v421
        %v423 = vpop.f32.mrb[0].mxu0
        %424 = vdwg.mxu0
        %425 = vst.msk [vmem:[%s248] sm:$0xff] %vm259, %v422
        %s426 = sand.u32 %s103, 1
        %s427 = scalar_lea.sflag [#allocation4], %s426
        %s428 = sand.u32 %s103, 1
        %s429 = smul.addr %s428, 8
        %s430 = scalar_lea.vmem [#allocation7], %s429
        %s431 = sand.u32 %s131, 1
        %s432 = scalar_lea.sflag [#allocation9], %s431
        %s433 = sand.u32 %s131, 1
        %s434 = smul.addr %s433, 8
        %s435 = scalar_lea.vmem [#allocation8], %s434
        // Predicated region
        $region37: #{tpu_custom_call.1} parent=27 // pred_check
          %p436 = pneg %p113
        $region38: #{tpu_custom_call.1} parent=27 // pred_check_branch
          %438 = sbr.rel (%p436) target = $region40
        $region39: #{tpu_custom_call.1} parent=27 // pred_region
          %s440 = ssub.s32 128, 128
          %441 = vsyncadd %s427, %s440
          %s442 = sadd.s32 %s32, %s31
          %s443 = smul.addr %s442, 128
          %s444 = scalar_lea.hbm %s2, %s443
          %s446 = sshll.u32 %s430, 4
          %s447 = int_to_ptr.vmem [resolvable:$true] %s446
          %449 = dma.vmem_to_hbm [thread:$0]  %s447, 128, %s444, %s427
        $region40: #{tpu_custom_call.1} parent=27 // pred_fallthru
          _
        // Predicated region
        $region41: #{tpu_custom_call.1} parent=27 // pred_check
          %p450 = pneg %p141
        $region42: #{tpu_custom_call.1} parent=27 // pred_check_branch
          %452 = sbr.rel (%p450) target = $region44
        $region43: #{tpu_custom_call.1} parent=27 // pred_region
          %s454 = ssub.s32 128, 128
          %455 = vsyncadd %s432, %s454
          %s456 = sadd.s32 %s32, %s31
          %s457 = smul.addr %s456, 128
          %s458 = scalar_lea.hbm %s3, %s457
          %s460 = sshll.u32 %s435, 4
          %s461 = int_to_ptr.vmem [resolvable:$true] %s460
          %463 = dma.vmem_to_hbm [thread:$0]  %s461, 128, %s458, %s432
        $region44: #{tpu_custom_call.1} parent=27 // pred_fallthru
          _
      $region28: #{tpu_custom_call.1} parent=5 // pred_fallthru
        _
      %p464 = scmp.le.s32.totalorder 2, %s22
      // Predicated region
      $region45: #{tpu_custom_call.1} parent=5 // pred_check
        %p465 = pneg %p464
      $region46: #{tpu_custom_call.1} parent=5 // pred_check_branch
        %467 = sbr.rel (%p465) target = $region48
      $region47: #{tpu_custom_call.1} parent=5 // pred_region
        %s468 = ssub.s32 %s22, 2
        // Predicated region
        $region49: #{tpu_custom_call.1} parent=47 // pred_check
          %p469 = pneg %p119
        $region50: #{tpu_custom_call.1} parent=47 // pred_check_branch
          %471 = sbr.rel (%p469) target = $region52
        $region51: #{tpu_custom_call.1} parent=47 // pred_region
          %s472 = sand.u32 %s104, 1
          %s473 = scalar_lea.sflag [#allocation4], %s472
          %s474 = sand.u32 %s104, 1
          %s475 = smul.addr %s474, 8
          %s476 = scalar_lea.vmem [#allocation7], %s475
          %477 = dma.done %s473, 128
        $region52: #{tpu_custom_call.1} parent=47 // pred_fallthru
          _
        // Predicated region
        $region53: #{tpu_custom_call.1} parent=47 // pred_check
          %p478 = pneg %p147
        $region54: #{tpu_custom_call.1} parent=47 // pred_check_branch
          %480 = sbr.rel (%p478) target = $region56
        $region55: #{tpu_custom_call.1} parent=47 // pred_region
          %s481 = sand.u32 %s132, 1
          %s482 = scalar_lea.sflag [#allocation9], %s481
          %s483 = sand.u32 %s132, 1
          %s484 = smul.addr %s483, 8
          %s485 = scalar_lea.vmem [#allocation8], %s484
          %486 = dma.done %s482, 128
        $region56: #{tpu_custom_call.1} parent=47 // pred_fallthru
          _
      $region48: #{tpu_custom_call.1} parent=5 // pred_fallthru
        _
    $region6: #{tpu_custom_call.1} parent=1 // loop_footer
      %s26 = sadd.s32 1, %s22
    $region7: #{tpu_custom_call.1} parent=1 // loop_footer_branch
      %21 = sbr.rel target = $region3
    $region8: #{tpu_custom_call.1} parent=1 // loop_exit
      _
    %487 = vsyncpa [#allocation3], 1
    %s488 = scalar_lea.sflag [#allocation3], 1
    %489 = vsyncpa %s488, 1
    %490 = vsyncpa [#allocation6], 1
    %s491 = scalar_lea.sflag [#allocation6], 1
    %492 = vsyncpa %s491, 1
    %493 = vsyncpa [#allocation4], 1
    %s494 = scalar_lea.sflag [#allocation4], 1
    %495 = vsyncpa %s494, 1
    %496 = vsyncpa [#allocation9], 1
    %s497 = scalar_lea.sflag [#allocation9], 1
    %498 = vsyncpa %s497, 1

</llo_original>
